<compile_context>
chip_gen: v7x
topology: tpu7x:2x2x1
jax: 0.10.0
libtpu: 0.0.40
codegen_flags: <defaults>
</compile_context>

<pallas_src>
import jax
import jax.numpy as jnp
from jax import lax
from jax.experimental import pallas as pl
from jax.experimental.pallas import tpu as pltpu


# ----------------------------------------------------------- static geometry --
CIN, H, W = 4, 14, 38                 # conv input (1, 4, 14, 38)
COUT1, K1, S1, P1 = 4, 6, 2, 3        # Conv2d(4->4, k=6, s=2, p=3, bias=False)
OH1, OW1 = 8, 20                      # conv output spatial (1, 4, 8, 20)
K2, OP2 = 9, 2                        # ConvTranspose2d(4->1, k=9, s=1, p=0, op=2)
OH2 = OH1 + K2 - 1 + OP2              # 18
OW2 = OW1 + K2 - 1 + OP2              # 30

KDIM1 = CIN * K1 * K1                 # 144  stage-1 contraction (cj, kh, kw)
OWP = 32                              # ix padded 20 -> 32 inside patch columns
NCOL1 = OH1 * OWP                     # 256  stage-1 output columns (iy, ix)
MZ = OH1 * COUT1                      # 32   staged conv-result rows (iy, ci)
KDIM2 = K2 * MZ                       # 288  stage-2 contraction (kx, iy, ci)
SHIFT = K2 - 1                        # 8    max lane shift in stage 2
MO, NO = 24, 128                      # padded output tile (18->24 rows, 30->128 lanes)
ZS_W = 2 * NO                         # 256  staging-buffer width (>= SHIFT + NO)


# ------------------------------------------------------------------ kernel ----
def _fused_conv_convt_sigmoid_kernel(w1_ref, p_ref, lw_ref, b_ref,
                                     o_ref, zs_ref, r2_ref):
    # scalar bias first (scalar slot; overlaps with the vector/MXU work below)
    bias = b_ref[0, 0]

    # ---- stage 1: strided Conv2d as one MXU matmul ---------------------------
    # z4[ci, iy*32 + ix] == conv(X0)[0, ci, iy, ix]   (columns ix >= 20 are 0)
    z4 = jnp.dot(w1_ref[...], p_ref[...], preferred_element_type=jnp.float32)

    # Park the conv result as (iy, ci)-rows x ix-lanes in a zero-padded staging
    # buffer, with the real data starting at lane SHIFT (= 8).
    zs_ref[...] = jnp.zeros_like(zs_ref)
    for iy in range(OH1):                                   # 8 static sub-stores
        zs_ref[pl.ds(iy * COUT1, COUT1), pl.ds(SHIFT, OWP)] = (
            z4[:, iy * OWP:(iy + 1) * OWP])

    # ---- stage 2 staging: 9 aligned, full-width (32, 128) stores -------------
    # r2[kx*32 + iy*4 + ci, ox] = z[ci, iy, ox - kx]   (zeros outside [0, 20))
    # The zero padding on both sides of zs plays the role of pltpu.roll's zero
    # wrap; stores land at 8-aligned sublane offsets with all 128 lanes written.
    for kx in range(K2):
        r2_ref[pl.ds(kx * MZ, MZ), :] = zs_ref[:, pl.ds(SHIFT - kx, NO)]

    # ---- stage 2: ConvTranspose2d as a second MXU matmul + epilogue ----------
    acc = jnp.dot(lw_ref[...], r2_ref[...], preferred_element_type=jnp.float32)
    o_ref[...] = jax.nn.sigmoid(acc + bias)                 # (24, 128) lane-dense


# ------------------------------------------------- init-time weight packing ---
def init_params(w1, wt, bt):
    """Pack all weight-only operands ONCE (hoisted out of the per-call path)."""
    # stage-1 weight matrix: (4, 144), contraction order (cj, kh, kw)
    w1m = w1.reshape(COUT1, KDIM1)

    # stage-2 weight matrix: lhs2[oy, kx*32 + iy*4 + ci] = wt[ci, 0, oy-iy, kx]
    # when 0 <= oy - iy < 9, else 0; rows 18..23 are padding.
    wt0 = wt[:, 0]                                              # (4, 9, 9) [ci, dy, kx]
    oy = jnp.arange(OH2)[:, None, None, None]
    kx = jnp.arange(K2)[None, :, None, None]
    iy = jnp.arange(OH1)[None, None, :, None]
    ci = jnp.arange(COUT1)[None, None, None, :]
    dy = oy - iy
    vals = wt0[ci, jnp.clip(dy, 0, K2 - 1), kx]                 # (18, 9, 8, 4)
    lhs2 = jnp.where((dy >= 0) & (dy < K2), vals, 0.0).reshape(OH2, KDIM2)
    lhs2 = jnp.pad(lhs2, ((0, MO - OH2), (0, 0)))               # (24, 288)

    return w1m, lhs2, bt.reshape(1, 1)


# ---------------------------------------------------- per-call patch builder --
def _build_patches(x):
    """x-dependent im2col (static slices, no gather):
       patches[(cj,kh,kw), iy*32+ix] = xpad[cj, 2*iy+kh, 2*ix+kw] (ix<20, else 0)."""
    xp = jnp.pad(x[0], ((0, 0), (P1, P1), (P1, P1)))                 # (4, 20, 44)
    cols = [xp[:, kh:kh + S1 * OH1:S1, kw:kw + S1 * OW1:S1]          # 36 x (4, 8, 20)
            for kh in range(K1) for kw in range(K1)]
    p = jnp.stack(cols, axis=0).reshape(K1, K1, CIN, OH1, OW1)
    p = p.transpose(2, 0, 1, 3, 4).reshape(KDIM1, OH1, OW1)          # (144, 8, 20)
    p = jnp.pad(p, ((0, 0), (0, 0), (0, OWP - OW1)))                 # (144, 8, 32)
    return p.reshape(KDIM1, NCOL1)                                   # (144, 256)


# ---------------------------------------------------------------- forward -----
def model_forward(x, w1m, lhs2, bias):
    patches = _build_patches(x)

    cost = pl.CostEstimate(
        flops=2 * (COUT1 * KDIM1 * NCOL1 + MO * KDIM2 * NO),
        transcendentals=MO * NO,
        bytes_accessed=4 * (COUT1 * KDIM1 + KDIM1 * NCOL1 + MO * KDIM2
                            + MO * NO + 1),
    )
    vmem = pl.BlockSpec(memory_space=pltpu.MemorySpace.VMEM)
    smem = pl.BlockSpec(memory_space=pltpu.MemorySpace.SMEM)

    out = pl.pallas_call(
        _fused_conv_convt_sigmoid_kernel,
        out_shape=jax.ShapeDtypeStruct((MO, NO), jnp.float32),
        in_specs=[vmem, vmem, vmem, smem],
        out_specs=vmem,
        scratch_shapes=[pltpu.VMEM((MZ, ZS_W), jnp.float32),
                        pltpu.VMEM((KDIM2, NO), jnp.float32)],
        cost_estimate=cost,
    )(w1m, patches, lhs2, bias)

    # v1 = conv(X0).flatten(1) ; v2 = conv_t(v1).reshape(1,1,18,30) ; v3 = sigmoid
    return out[:OH2, :OW2].reshape(1, 1, OH2, OW2)


# -------------------------------------------------------------------- main ----
if __name__ == "__main__":
    key = jax.random.PRNGKey(0)
    k1, k2, k3, k4 = jax.random.split(key, 4)

    x = jax.random.normal(k1, (1, CIN, H, W), jnp.float32)
    # TODO(synk): original Conv2d omits in/out channels (invalid torch); we pick
    # in_channels=4, out_channels=4 so the flattened output is the (1,4,8,20)
    # tensor that ConvTranspose2d(in_channels=4) consumes.
    w1 = jax.random.normal(k2, (COUT1, CIN, K1, K1), jnp.float32) * 0.1
    wt = jax.random.normal(k3, (COUT1, 1, K2, K2), jnp.float32) * 0.1
    bt = jax.random.normal(k4, (1,), jnp.float32)

    params = init_params(w1, wt, bt)     # weight packing done once, off the hot path
    fwd = jax.jit(model_forward)
    out = jax.block_until_ready(fwd(x, *params))
    assert out.shape == (1, 1, OH2, OW2) and out.dtype == jnp.float32

    # independent pure-XLA reference
    ref_conv = lax.conv_general_dilated(
        x, w1, (S1, S1), [(P1, P1), (P1, P1)],
        dimension_numbers=("NCHW", "OIHW", "NCHW"),
        precision=lax.Precision.HIGHEST)
    z = ref_conv.reshape(1, -1).reshape(1, COUT1, OH1, OW1)   # flatten -> reinterpret
    w_flip = jnp.transpose(wt, (1, 0, 2, 3))[:, :, ::-1, ::-1]    # (1,4,9,9) OIHW
    ref_ct = lax.conv_general_dilated(
        z, w_flip, (1, 1),
        [(K2 - 1, K2 - 1 + OP2), (K2 - 1, K2 - 1 + OP2)],
        dimension_numbers=("NCHW", "OIHW", "NCHW"),
        precision=lax.Precision.HIGHEST)
    ref = jax.nn.sigmoid(ref_ct + bt[0]).reshape(1, 1, OH2, OW2)
    err = float(jnp.max(jnp.abs(out - ref)))
    assert err < 1e-4, f"mismatch vs reference: {err}"

    print("KERNEL_OK")
</pallas_src>

<mosaic_0001>
module attributes {stable_mosaic.version = 11 : i64} {
  func.func @_fused_conv_convt_sigmoid_kernel(%arg0: memref<4x144xf32, #tpu.memory_space<vmem>>, %arg1: memref<144x256xf32, #tpu.memory_space<vmem>>, %arg2: memref<24x288xf32, #tpu.memory_space<vmem>>, %arg3: memref<1x1xf32, #tpu.memory_space<smem>>, %arg4: memref<24x128xf32, #tpu.memory_space<vmem>>, %arg5: memref<32x256xf32, #tpu.memory_space<vmem>>, %arg6: memref<288x128xf32, #tpu.memory_space<vmem>>) attributes {dimension_semantics = [], scalar_prefetch = 0 : i64, scratch_operands = 2 : i64, tpu.core_type = #tpu.core_type<tc>} {
    %c0 = arith.constant 0 : index
    %c0_0 = arith.constant 0 : index
    %0 = memref.load %arg3[%c0, %c0_0] : memref<1x1xf32, #tpu.memory_space<smem>>
    %c0_1 = arith.constant 0 : index
    %c0_2 = arith.constant 0 : index
    %1 = vector.load %arg0[%c0_1, %c0_2] : memref<4x144xf32, #tpu.memory_space<vmem>>, vector<4x144xf32>
    %c0_3 = arith.constant 0 : index
    %c0_4 = arith.constant 0 : index
    %2 = vector.load %arg1[%c0_3, %c0_4] : memref<144x256xf32, #tpu.memory_space<vmem>>, vector<144x256xf32>
    %cst = arith.constant dense<0.000000e+00> : vector<4x256xf32>
    %3 = tpu.matmul %1, %2, %cst {dimension_numbers = #tpu.dot_dimension_numbers<[1], [0], [0], [1], [0, 0, 1, 1], [], []>} : vector<4x144xf32>, vector<144x256xf32>, vector<4x256xf32> -> vector<4x256xf32>
    %cst_5 = arith.constant 0.000000e+00 : f32
    %4 = vector.broadcast %cst_5 : f32 to vector<32x256xf32>
    %c0_6 = arith.constant 0 : index
    %c0_7 = arith.constant 0 : index
    %5 = vector.load %arg5[%c0_6, %c0_7] : memref<32x256xf32, #tpu.memory_space<vmem>>, vector<32x256xf32>
    tpu.vector_store %arg5[%c0_6, %c0_7], %4 {strides = array<i32>} : memref<32x256xf32, #tpu.memory_space<vmem>>, vector<32x256xf32>,
    %6 = vector.extract_strided_slice %3 {offsets = [0, 0], sizes = [4, 32], strides = [1, 1]} : vector<4x256xf32> to vector<4x32xf32>
    %c0_8 = arith.constant 0 : index
    %c8 = arith.constant 8 : index
    %7 = vector.load %arg5[%c0_8, %c8] : memref<32x256xf32, #tpu.memory_space<vmem>>, vector<4x32xf32>
    tpu.vector_store %arg5[%c0_8, %c8], %6 {strides = array<i32>} : memref<32x256xf32, #tpu.memory_space<vmem>>, vector<4x32xf32>,
    %8 = vector.extract_strided_slice %3 {offsets = [0, 32], sizes = [4, 32], strides = [1, 1]} : vector<4x256xf32> to vector<4x32xf32>
    %c4 = arith.constant 4 : index
    %c8_9 = arith.constant 8 : index
    %9 = vector.load %arg5[%c4, %c8_9] : memref<32x256xf32, #tpu.memory_space<vmem>>, vector<4x32xf32>
    tpu.vector_store %arg5[%c4, %c8_9], %8 {strides = array<i32>} : memref<32x256xf32, #tpu.memory_space<vmem>>, vector<4x32xf32>,
    %10 = vector.extract_strided_slice %3 {offsets = [0, 64], sizes = [4, 32], strides = [1, 1]} : vector<4x256xf32> to vector<4x32xf32>
    %c8_10 = arith.constant 8 : index
    %c8_11 = arith.constant 8 : index
    %11 = vector.load %arg5[%c8_10, %c8_11] : memref<32x256xf32, #tpu.memory_space<vmem>>, vector<4x32xf32>
    tpu.vector_store %arg5[%c8_10, %c8_11], %10 {strides = array<i32>} : memref<32x256xf32, #tpu.memory_space<vmem>>, vector<4x32xf32>,
    %12 = vector.extract_strided_slice %3 {offsets = [0, 96], sizes = [4, 32], strides = [1, 1]} : vector<4x256xf32> to vector<4x32xf32>
    %c12 = arith.constant 12 : index
    %c8_12 = arith.constant 8 : index
    %13 = vector.load %arg5[%c12, %c8_12] : memref<32x256xf32, #tpu.memory_space<vmem>>, vector<4x32xf32>
    tpu.vector_store %arg5[%c12, %c8_12], %12 {strides = array<i32>} : memref<32x256xf32, #tpu.memory_space<vmem>>, vector<4x32xf32>,
    %14 = vector.extract_strided_slice %3 {offsets = [0, 128], sizes = [4, 32], strides = [1, 1]} : vector<4x256xf32> to vector<4x32xf32>
    %c16 = arith.constant 16 : index
    %c8_13 = arith.constant 8 : index
    %15 = vector.load %arg5[%c16, %c8_13] : memref<32x256xf32, #tpu.memory_space<vmem>>, vector<4x32xf32>
    tpu.vector_store %arg5[%c16, %c8_13], %14 {strides = array<i32>} : memref<32x256xf32, #tpu.memory_space<vmem>>, vector<4x32xf32>,
    %16 = vector.extract_strided_slice %3 {offsets = [0, 160], sizes = [4, 32], strides = [1, 1]} : vector<4x256xf32> to vector<4x32xf32>
    %c20 = arith.constant 20 : index
    %c8_14 = arith.constant 8 : index
    %17 = vector.load %arg5[%c20, %c8_14] : memref<32x256xf32, #tpu.memory_space<vmem>>, vector<4x32xf32>
    tpu.vector_store %arg5[%c20, %c8_14], %16 {strides = array<i32>} : memref<32x256xf32, #tpu.memory_space<vmem>>, vector<4x32xf32>,
    %18 = vector.extract_strided_slice %3 {offsets = [0, 192], sizes = [4, 32], strides = [1, 1]} : vector<4x256xf32> to vector<4x32xf32>
    %c24 = arith.constant 24 : index
    %c8_15 = arith.constant 8 : index
    %19 = vector.load %arg5[%c24, %c8_15] : memref<32x256xf32, #tpu.memory_space<vmem>>, vector<4x32xf32>
    tpu.vector_store %arg5[%c24, %c8_15], %18 {strides = array<i32>} : memref<32x256xf32, #tpu.memory_space<vmem>>, vector<4x32xf32>,
    %20 = vector.extract_strided_slice %3 {offsets = [0, 224], sizes = [4, 32], strides = [1, 1]} : vector<4x256xf32> to vector<4x32xf32>
    %c28 = arith.constant 28 : index
    %c8_16 = arith.constant 8 : index
    %21 = vector.load %arg5[%c28, %c8_16] : memref<32x256xf32, #tpu.memory_space<vmem>>, vector<4x32xf32>
    tpu.vector_store %arg5[%c28, %c8_16], %20 {strides = array<i32>} : memref<32x256xf32, #tpu.memory_space<vmem>>, vector<4x32xf32>,
    %c0_17 = arith.constant 0 : index
    %c8_18 = arith.constant 8 : index
    %22 = vector.load %arg5[%c0_17, %c8_18] : memref<32x256xf32, #tpu.memory_space<vmem>>, vector<32x128xf32>
    %c0_19 = arith.constant 0 : index
    %c0_20 = arith.constant 0 : index
    %23 = vector.load %arg6[%c0_19, %c0_20] : memref<288x128xf32, #tpu.memory_space<vmem>>, vector<32x128xf32>
    tpu.vector_store %arg6[%c0_19, %c0_20], %22 {strides = array<i32>} : memref<288x128xf32, #tpu.memory_space<vmem>>, vector<32x128xf32>,
    %c0_21 = arith.constant 0 : index
    %c7 = arith.constant 7 : index
    %24 = vector.load %arg5[%c0_21, %c7] : memref<32x256xf32, #tpu.memory_space<vmem>>, vector<32x128xf32>
    %c32 = arith.constant 32 : index
    %c0_22 = arith.constant 0 : index
    %25 = vector.load %arg6[%c32, %c0_22] : memref<288x128xf32, #tpu.memory_space<vmem>>, vector<32x128xf32>
    tpu.vector_store %arg6[%c32, %c0_22], %24 {strides = array<i32>} : memref<288x128xf32, #tpu.memory_space<vmem>>, vector<32x128xf32>,
    %c0_23 = arith.constant 0 : index
    %c6 = arith.constant 6 : index
    %26 = vector.load %arg5[%c0_23, %c6] : memref<32x256xf32, #tpu.memory_space<vmem>>, vector<32x128xf32>
    %c64 = arith.constant 64 : index
    %c0_24 = arith.constant 0 : index
    %27 = vector.load %arg6[%c64, %c0_24] : memref<288x128xf32, #tpu.memory_space<vmem>>, vector<32x128xf32>
    tpu.vector_store %arg6[%c64, %c0_24], %26 {strides = array<i32>} : memref<288x128xf32, #tpu.memory_space<vmem>>, vector<32x128xf32>,
    %c0_25 = arith.constant 0 : index
    %c5 = arith.constant 5 : index
    %28 = vector.load %arg5[%c0_25, %c5] : memref<32x256xf32, #tpu.memory_space<vmem>>, vector<32x128xf32>
    %c96 = arith.constant 96 : index
    %c0_26 = arith.constant 0 : index
    %29 = vector.load %arg6[%c96, %c0_26] : memref<288x128xf32, #tpu.memory_space<vmem>>, vector<32x128xf32>
    tpu.vector_store %arg6[%c96, %c0_26], %28 {strides = array<i32>} : memref<288x128xf32, #tpu.memory_space<vmem>>, vector<32x128xf32>,
    %c0_27 = arith.constant 0 : index
    %c4_28 = arith.constant 4 : index
    %30 = vector.load %arg5[%c0_27, %c4_28] : memref<32x256xf32, #tpu.memory_space<vmem>>, vector<32x128xf32>
    %c128 = arith.constant 128 : index
    %c0_29 = arith.constant 0 : index
    %31 = vector.load %arg6[%c128, %c0_29] : memref<288x128xf32, #tpu.memory_space<vmem>>, vector<32x128xf32>
    tpu.vector_store %arg6[%c128, %c0_29], %30 {strides = array<i32>} : memref<288x128xf32, #tpu.memory_space<vmem>>, vector<32x128xf32>,
    %c0_30 = arith.constant 0 : index
    %c3 = arith.constant 3 : index
    %32 = vector.load %arg5[%c0_30, %c3] : memref<32x256xf32, #tpu.memory_space<vmem>>, vector<32x128xf32>
    %c160 = arith.constant 160 : index
    %c0_31 = arith.constant 0 : index
    %33 = vector.load %arg6[%c160, %c0_31] : memref<288x128xf32, #tpu.memory_space<vmem>>, vector<32x128xf32>
    tpu.vector_store %arg6[%c160, %c0_31], %32 {strides = array<i32>} : memref<288x128xf32, #tpu.memory_space<vmem>>, vector<32x128xf32>,
    %c0_32 = arith.constant 0 : index
    %c2 = arith.constant 2 : index
    %34 = vector.load %arg5[%c0_32, %c2] : memref<32x256xf32, #tpu.memory_space<vmem>>, vector<32x128xf32>
    %c192 = arith.constant 192 : index
    %c0_33 = arith.constant 0 : index
    %35 = vector.load %arg6[%c192, %c0_33] : memref<288x128xf32, #tpu.memory_space<vmem>>, vector<32x128xf32>
    tpu.vector_store %arg6[%c192, %c0_33], %34 {strides = array<i32>} : memref<288x128xf32, #tpu.memory_space<vmem>>, vector<32x128xf32>,
    %c0_34 = arith.constant 0 : index
    %c1 = arith.constant 1 : index
    %36 = vector.load %arg5[%c0_34, %c1] : memref<32x256xf32, #tpu.memory_space<vmem>>, vector<32x128xf32>
    %c224 = arith.constant 224 : index
    %c0_35 = arith.constant 0 : index
    %37 = vector.load %arg6[%c224, %c0_35] : memref<288x128xf32, #tpu.memory_space<vmem>>, vector<32x128xf32>
    tpu.vector_store %arg6[%c224, %c0_35], %36 {strides = array<i32>} : memref<288x128xf32, #tpu.memory_space<vmem>>, vector<32x128xf32>,
    %c0_36 = arith.constant 0 : index
    %c0_37 = arith.constant 0 : index
    %38 = vector.load %arg5[%c0_36, %c0_37] : memref<32x256xf32, #tpu.memory_space<vmem>>, vector<32x128xf32>
    %c256 = arith.constant 256 : index
    %c0_38 = arith.constant 0 : index
    %39 = vector.load %arg6[%c256, %c0_38] : memref<288x128xf32, #tpu.memory_space<vmem>>, vector<32x128xf32>
    tpu.vector_store %arg6[%c256, %c0_38], %38 {strides = array<i32>} : memref<288x128xf32, #tpu.memory_space<vmem>>, vector<32x128xf32>,
    %c0_39 = arith.constant 0 : index
    %c0_40 = arith.constant 0 : index
    %40 = vector.load %arg2[%c0_39, %c0_40] : memref<24x288xf32, #tpu.memory_space<vmem>>, vector<24x288xf32>
    %c0_41 = arith.constant 0 : index
    %c0_42 = arith.constant 0 : index
    %41 = vector.load %arg6[%c0_41, %c0_42] : memref<288x128xf32, #tpu.memory_space<vmem>>, vector<288x128xf32>
    %cst_43 = arith.constant dense<0.000000e+00> : vector<24x128xf32>
    %42 = tpu.matmul %40, %41, %cst_43 {dimension_numbers = #tpu.dot_dimension_numbers<[1], [0], [0], [1], [0, 0, 1, 1], [], []>} : vector<24x288xf32>, vector<288x128xf32>, vector<24x128xf32> -> vector<24x128xf32>
    %43 = vector.broadcast %0 : f32 to vector<24x128xf32>
    %44 = arith.addf %42, %43 : vector<24x128xf32>
    %45 = arith.negf %44 : vector<24x128xf32>
    %46 = math.exp %45 : vector<24x128xf32>
    %cst_44 = arith.constant 1.000000e+00 : f32
    %47 = vector.broadcast %cst_44 : f32 to vector<24x128xf32>
    %48 = arith.addf %47, %46 : vector<24x128xf32>
    %49 = arith.divf %47, %48 : vector<24x128xf32>
    %c0_45 = arith.constant 0 : index
    %c0_46 = arith.constant 0 : index
    %50 = vector.load %arg4[%c0_45, %c0_46] : memref<24x128xf32, #tpu.memory_space<vmem>>, vector<24x128xf32>
    tpu.vector_store %arg4[%c0_45, %c0_46], %49 {strides = array<i32>} : memref<24x128xf32, #tpu.memory_space<vmem>>, vector<24x128xf32>,
    return
  }
}

</mosaic_0001>

<llo_original>
// kernel: model_forward.1
$region0: #{model_forward.1}
  #allocation0 [shape = 'u32[]', space=smem, size = 0x4, offset = 0x4, fixed_abs, tag = 'smem constant byte address 0x4 - core index']
  #allocation1 [shape = 'u32[144,128]{1,0:T(1,128)}', space=vmem, size = 0x12000, scoped, tag = 'internal scratch']
  #allocation2 [shape = 'f32[32,256]{1,0:T(8,128)}', space=vmem, size = 0x8000, scoped, tag = 'scratch operand']
  #allocation3 [shape = 'f32[288,128]{1,0:T(8,128)}', space=vmem, size = 0x24000, scoped, tag = 'scratch operand']
  #allocation4 [shape = 'f32[1,1]{1,0:T(1,128)S(6)}', space=smem, size = 0x200, scoped, tag = 'scoped memory for model_forward.1']
  %s0 = inlined_call_operand.vmem [shape: f32[4,144], index: 0, kind: input, shape index: {}]
  %s1 = inlined_call_operand.vmem [shape: f32[144,256], index: 1, kind: input, shape index: {}]
  %s2 = inlined_call_operand.vmem [shape: f32[24,288], index: 2, kind: input, shape index: {}]
  %s3 = inlined_call_operand.<no memory space> [shape: f32[1,1], index: 3, kind: input, shape index: {}]
  %s4 = inlined_call_operand.vmem [shape: f32[24,128], index: 4, kind: output, shape index: {}]
  %s5 = sld [smem:[#allocation0]]
  $region26: #{model_forward.1} parent=0
    _
  %s7 = ssub.s32 1, %s5
  %s8 = scalar_select 0, %s7, %s5
  %9 = sst [smem:[#allocation4]] %s3
  // Predicated region
  $region2: #{model_forward.1} parent=0 // pred_check
    _
  $region3: #{model_forward.1} parent=0 // pred_check_branch
    %11 = sbr.rel (0) target = $region5
  $region4: #{model_forward.1} parent=0 // pred_region
    _
  $region5: #{model_forward.1} parent=0 // pred_fallthru
    _
  // Predicated region
  $region6: #{model_forward.1} parent=0 // pred_check
    _
  $region7: #{model_forward.1} parent=0 // pred_check_branch
    %13 = sbr.rel (0) target = $region9
  $region8: #{model_forward.1} parent=0 // pred_region
    _
  $region9: #{model_forward.1} parent=0 // pred_fallthru
    _
  // Predicated region
  $region10: #{model_forward.1} parent=0 // pred_check
    _
  $region11: #{model_forward.1} parent=0 // pred_check_branch
    %15 = sbr.rel (0) target = $region13
  $region12: #{model_forward.1} parent=0 // pred_region
    _
  $region13: #{model_forward.1} parent=0 // pred_fallthru
    _
  // Predicated region
  $region14: #{model_forward.1} parent=0 // pred_check
    _
  $region15: #{model_forward.1} parent=0 // pred_check_branch
    %17 = sbr.rel (0) target = $region17
  $region16: #{model_forward.1} parent=0 // pred_region
    _
  $region17: #{model_forward.1} parent=0 // pred_fallthru
    _
  %s18 = sld [smem:[#allocation4]]
  %v19 = vld [vmem:[%s0] sm:$0xff]
  %v20 = vld [vmem:[%s1] sm:$0xff]
  %v21 = vld [vmem:[%s1 + $0x8] sm:$0xff]
  %v22 = vld [vmem:[%s1 + $0x10] sm:$0xff]
  %v23 = vld [vmem:[%s1 + $0x18] sm:$0xff]
  %v24 = vld [vmem:[%s1 + $0x20] sm:$0xff]
  %v25 = vld [vmem:[%s1 + $0x28] sm:$0xff]
  %v26 = vld [vmem:[%s1 + $0x30] sm:$0xff]
  %v27 = vld [vmem:[%s1 + $0x38] sm:$0xff]
  %v28 = vld [vmem:[%s1 + $0x40] sm:$0xff]
  %v29 = vld [vmem:[%s1 + $0x48] sm:$0xff]
  %v30 = vld [vmem:[%s1 + $0x50] sm:$0xff]
  %v31 = vld [vmem:[%s1 + $0x58] sm:$0xff]
  %v32 = vld [vmem:[%s1 + $0x60] sm:$0xff]
  %v33 = vld [vmem:[%s1 + $0x68] sm:$0xff]
  %v34 = vld [vmem:[%s1 + $0x70] sm:$0xff]
  %v35 = vld [vmem:[%s1 + $0x78] sm:$0xff]
  %v36 = vld [vmem:[%s1 + $0x80] sm:$0xff]
  %v37 = vld [vmem:[%s1 + $0x88] sm:$0xff]
  %v38 = vld [vmem:[%s1 + $0x90] sm:$0xff]
  %v39 = vld [vmem:[%s1 + $0x98] sm:$0xff]
  %v40 = vld [vmem:[%s1 + $0xa0] sm:$0xff]
  %v41 = vld [vmem:[%s1 + $0xa8] sm:$0xff]
  %v42 = vld [vmem:[%s1 + $0xb0] sm:$0xff]
  %v43 = vld [vmem:[%s1 + $0xb8] sm:$0xff]
  %v44 = vld [vmem:[%s1 + $0xc0] sm:$0xff]
  %v45 = vld [vmem:[%s1 + $0xc8] sm:$0xff]
  %v46 = vld [vmem:[%s1 + $0xd0] sm:$0xff]
  %v47 = vld [vmem:[%s1 + $0xd8] sm:$0xff]
  %v48 = vld [vmem:[%s1 + $0xe0] sm:$0xff]
  %v49 = vld [vmem:[%s1 + $0xe8] sm:$0xff]
  %v50 = vld [vmem:[%s1 + $0xf0] sm:$0xff]
  %v51 = vld [vmem:[%s1 + $0xf8] sm:$0xff]
  %v52 = vld [vmem:[%s1 + $0x100] sm:$0xff]
  %v53 = vld [vmem:[%s1 + $0x108] sm:$0xff]
  %v54 = vld [vmem:[%s1 + $0x110] sm:$0xff]
  %v55 = vld [vmem:[%s1 + $0x118] sm:$0xff]
  %v57 = vcombine.high %v19, %v19
  %vm58 = vcmask 130048
  %v59 = vsel %vm58, %v57, 0
  %61 = vmatprep.subr.mxu0 %v21
  %62 = vmatpush1.msra.mxu0 %v20
  %63 = vmatprep.subr.mxu0 %v23
  %64 = vmatpush1.msra.mxu0 %v22
  %65 = vmatprep.subr.mxu0 %v25
  %66 = vmatpush1.msra.mxu0 %v24
  %67 = vmatprep.subr.mxu0 %v27
  %68 = vmatpush1.msra.mxu0 %v26
  %69 = vmatprep.subr.mxu0 %v29
  %70 = vmatpush1.msra.mxu0 %v28
  %71 = vmatprep.subr.mxu0 %v31
  %72 = vmatpush1.msra.mxu0 %v30
  %73 = vmatprep.subr.mxu0 %v33
  %74 = vmatpush1.msra.mxu0 %v32
  %75 = vmatprep.subr.mxu0 %v35
  %76 = vmatpush1.msra.mxu0 %v34
  %77 = vmatprep.subr.mxu0 %v37
  %78 = vmatpush1.msra.mxu0 %v36
  %79 = vmatprep.subr.mxu0 %v39
  %80 = vmatpush1.msra.mxu0 %v38
  %81 = vmatprep.subr.mxu0 %v41
  %82 = vmatpush1.msra.mxu0 %v40
  %83 = vmatprep.subr.mxu0 %v43
  %84 = vmatpush1.msra.mxu0 %v42
  %85 = vmatprep.subr.mxu0 %v45
  %86 = vmatpush1.msra.mxu0 %v44
  %87 = vmatprep.subr.mxu0 %v47
  %88 = vmatpush1.msra.mxu0 %v46
  %89 = vmatprep.subr.mxu0 %v49
  %90 = vmatpush1.msra.mxu0 %v48
  %91 = vmatprep.subr.mxu0 %v51
  %92 = vmatpush1.msra.mxu0 %v50
  %93 = vmatprep.subr.mxu0 %v53
  %94 = vmatpush1.msra.mxu0 %v52
  %95 = vmatprep.subr.mxu0 %v55
  %96 = vmatpush1.msra.mxu0 %v54
  %97 = vmatprep.subr.mxu0 0.0
  %98 = vmatpush1.msra.mxu0 0.0
  %99 = vmatprep.subr.mxu0 0.0
  %100 = vmatpush1.msra.mxu0 0.0
  %101 = vmatprep.subr.mxu0 0.0
  %102 = vmatpush1.msra.mxu0 0.0
  %103 = vmatprep.subr.mxu0 0.0
  %104 = vmatpush1.msra.mxu0 0.0
  %105 = vmatprep.subr.mxu0 0.0
  %106 = vmatpush1.msra.mxu0 0.0
  %107 = vmatprep.subr.mxu0 0.0
  %108 = vmatpush1.msra.mxu0 0.0
  %109 = vmatprep.subr.mxu0 0.0
  %110 = vmatpush1.msra.mxu0 0.0
  %111 = vmatprep.subr.mxu0 0.0
  %112 = vmatpush1.msra.mxu0 0.0
  %113 = vmatprep.subr.mxu0 0.0
  %114 = vmatpush1.msra.mxu0 0.0
  %115 = vmatprep.subr.mxu0 0.0
  %116 = vmatpush1.msra.mxu0 0.0
  %117 = vmatprep.subr.mxu0 0.0
  %118 = vmatpush1.msra.mxu0 0.0
  %119 = vmatprep.subr.mxu0 0.0
  %120 = vmatpush1.msra.mxu0 0.0
  %121 = vmatprep.subr.mxu0 0.0
  %122 = vmatpush1.msra.mxu0 0.0
  %123 = vmatprep.subr.mxu0 0.0
  %124 = vmatpush1.msra.mxu0 0.0
  %125 = vmatprep.mubr.f32.mxu0 %v59
  %126 = vmatmul.mubr.f32.gmra.mrb[0].mxu0 %v19
  %v127 = vpop.f32.mrb[0].mxu0
  %v128 = vadd.f32 0.0, %v127
  %v129 = vpop.f32.mrb[0].mxu0
  %v130 = vadd.f32 0.0, %v129
  %131 = vdwg.mxu0
  %132 = vst [vmem:[#allocation2] sm:$0xff] 0.0
  %133 = vst [vmem:[#allocation2 + $0x8] sm:$0xff] 0.0
  %134 = vst [vmem:[#allocation2 + $0x10] sm:$0xff] 0.0
  %135 = vst [vmem:[#allocation2 + $0x18] sm:$0xff] 0.0
  %136 = vst [vmem:[#allocation2 + $0x20] sm:$0xff] 0.0
  %137 = vst [vmem:[#allocation2 + $0x28] sm:$0xff] 0.0
  %138 = vst [vmem:[#allocation2 + $0x30] sm:$0xff] 0.0
  %139 = vst [vmem:[#allocation2 + $0x38] sm:$0xff] 0.0
  %141 = vrot.lane.b32.xlu0 %v128, 8
  %v142 = vpop.permute.xlu0 %141
  %vm144 = vcmask 322624
  %145 = vst.msk [vmem:[#allocation2] sm:$0xf] %vm144, %v142
  %v146 = vrot.slane %v128, 4
  %147 = vrot.lane.b32.xlu0 %v146, 104
  %v148 = vpop.permute.xlu0 %147
  %vm150 = vcmask 326724
  %151 = vst.msk [vmem:[#allocation2] sm:$0xf0] %vm150, %v148
  %152 = vrot.lane.b32.xlu0 %v128, 72
  %v153 = vpop.permute.xlu0 %152
  %155 = vst.msk [vmem:[#allocation2 + $0x10] sm:$0xf] %vm144, %v153
  %156 = vrot.lane.b32.xlu0 %v146, 40
  %v157 = vpop.permute.xlu0 %156
  %159 = vst.msk [vmem:[#allocation2 + $0x10] sm:$0xf0] %vm150, %v157
  %161 = vrot.lane.b32.xlu0 %v130, 8
  %v162 = vpop.permute.xlu0 %161
  %164 = vst.msk [vmem:[#allocation2 + $0x20] sm:$0xf] %vm144, %v162
  %v165 = vrot.slane %v130, 4
  %166 = vrot.lane.b32.xlu0 %v165, 104
  %v167 = vpop.permute.xlu0 %166
  %169 = vst.msk [vmem:[#allocation2 + $0x20] sm:$0xf0] %vm150, %v167
  %170 = vrot.lane.b32.xlu0 %v130, 72
  %v171 = vpop.permute.xlu0 %170
  %173 = vst.msk [vmem:[#allocation2 + $0x30] sm:$0xf] %vm144, %v171
  %174 = vrot.lane.b32.xlu0 %v165, 40
  %v175 = vpop.permute.xlu0 %174
  %177 = vst.msk [vmem:[#allocation2 + $0x30] sm:$0xf0] %vm150, %v175
  %v178 = vld [vmem:[#allocation2] sm:$0xff]
  %v179 = vld [vmem:[#allocation2 + $0x8] sm:$0xff]
  %v180 = vld [vmem:[#allocation2 + $0x10] sm:$0xff]
  %v181 = vld [vmem:[#allocation2 + $0x18] sm:$0xff]
  %v182 = vld [vmem:[#allocation2 + $0x20] sm:$0xff]
  %v183 = vld [vmem:[#allocation2 + $0x28] sm:$0xff]
  %v184 = vld [vmem:[#allocation2 + $0x30] sm:$0xff]
  %v185 = vld [vmem:[#allocation2 + $0x38] sm:$0xff]
  %194 = vrot.lane.b32.xlu0 %v178, 120
  %v195 = vpop.permute.xlu0 %194
  %196 = vrot.lane.b32.xlu0 %v179, 120
  %v197 = vpop.permute.xlu0 %196
  %198 = vrot.lane.b32.xlu0 %v180, 120
  %v199 = vpop.permute.xlu0 %198
  %200 = vrot.lane.b32.xlu0 %v181, 120
  %v201 = vpop.permute.xlu0 %200
  %202 = vrot.lane.b32.xlu0 %v182, 120
  %v203 = vpop.permute.xlu0 %202
  %204 = vrot.lane.b32.xlu0 %v183, 120
  %v205 = vpop.permute.xlu0 %204
  %206 = vrot.lane.b32.xlu0 %v184, 120
  %v207 = vpop.permute.xlu0 %206
  %208 = vrot.lane.b32.xlu0 %v185, 120
  %v209 = vpop.permute.xlu0 %208
  %vm210 = vcmask 982016
  %v211 = vsel %vm210, %v195, %v197
  %v212 = vsel %vm210, %v199, %v201
  %v213 = vsel %vm210, %v203, %v205
  %v214 = vsel %vm210, %v207, %v209
  %219 = vst [vmem:[#allocation3] sm:$0xff] %v211
  %220 = vst [vmem:[#allocation3 + $0x8] sm:$0xff] %v212
  %221 = vst [vmem:[#allocation3 + $0x10] sm:$0xff] %v213
  %222 = vst [vmem:[#allocation3 + $0x18] sm:$0xff] %v214
  %v223 = vld [vmem:[#allocation2] sm:$0xff]
  %v224 = vld [vmem:[#allocation2 + $0x8] sm:$0xff]
  %v225 = vld [vmem:[#allocation2 + $0x10] sm:$0xff]
  %v226 = vld [vmem:[#allocation2 + $0x18] sm:$0xff]
  %v227 = vld [vmem:[#allocation2 + $0x20] sm:$0xff]
  %v228 = vld [vmem:[#allocation2 + $0x28] sm:$0xff]
  %v229 = vld [vmem:[#allocation2 + $0x30] sm:$0xff]
  %v230 = vld [vmem:[#allocation2 + $0x38] sm:$0xff]
  %239 = vrot.lane.b32.xlu0 %v223, 121
  %v240 = vpop.permute.xlu0 %239
  %241 = vrot.lane.b32.xlu0 %v224, 121
  %v242 = vpop.permute.xlu0 %241
  %243 = vrot.lane.b32.xlu0 %v225, 121
  %v244 = vpop.permute.xlu0 %243
  %245 = vrot.lane.b32.xlu0 %v226, 121
  %v246 = vpop.permute.xlu0 %245
  %247 = vrot.lane.b32.xlu0 %v227, 121
  %v248 = vpop.permute.xlu0 %247
  %249 = vrot.lane.b32.xlu0 %v228, 121
  %v250 = vpop.permute.xlu0 %249
  %251 = vrot.lane.b32.xlu0 %v229, 121
  %v252 = vpop.permute.xlu0 %251
  %253 = vrot.lane.b32.xlu0 %v230, 121
  %v254 = vpop.permute.xlu0 %253
  %vm255 = vcmask 990208
  %v256 = vsel %vm255, %v240, %v242
  %v257 = vsel %vm255, %v244, %v246
  %v258 = vsel %vm255, %v248, %v250
  %v259 = vsel %vm255, %v252, %v254
  %264 = vst [vmem:[#allocation3 + $0x20] sm:$0xff] %v256
  %265 = vst [vmem:[#allocation3 + $0x28] sm:$0xff] %v257
  %266 = vst [vmem:[#allocation3 + $0x30] sm:$0xff] %v258
  %267 = vst [vmem:[#allocation3 + $0x38] sm:$0xff] %v259
  %v268 = vld [vmem:[#allocation2] sm:$0xff]
  %v269 = vld [vmem:[#allocation2 + $0x8] sm:$0xff]
  %v270 = vld [vmem:[#allocation2 + $0x10] sm:$0xff]
  %v271 = vld [vmem:[#allocation2 + $0x18] sm:$0xff]
  %v272 = vld [vmem:[#allocation2 + $0x20] sm:$0xff]
  %v273 = vld [vmem:[#allocation2 + $0x28] sm:$0xff]
  %v274 = vld [vmem:[#allocation2 + $0x30] sm:$0xff]
  %v275 = vld [vmem:[#allocation2 + $0x38] sm:$0xff]
  %284 = vrot.lane.b32.xlu0 %v268, 122
  %v285 = vpop.permute.xlu0 %284
  %286 = vrot.lane.b32.xlu0 %v269, 122
  %v287 = vpop.permute.xlu0 %286
  %288 = vrot.lane.b32.xlu0 %v270, 122
  %v289 = vpop.permute.xlu0 %288
  %290 = vrot.lane.b32.xlu0 %v271, 122
  %v291 = vpop.permute.xlu0 %290
  %292 = vrot.lane.b32.xlu0 %v272, 122
  %v293 = vpop.permute.xlu0 %292
  %294 = vrot.lane.b32.xlu0 %v273, 122
  %v295 = vpop.permute.xlu0 %294
  %296 = vrot.lane.b32.xlu0 %v274, 122
  %v297 = vpop.permute.xlu0 %296
  %298 = vrot.lane.b32.xlu0 %v275, 122
  %v299 = vpop.permute.xlu0 %298
  %vm300 = vcmask 998400
  %v301 = vsel %vm300, %v285, %v287
  %v302 = vsel %vm300, %v289, %v291
  %v303 = vsel %vm300, %v293, %v295
  %v304 = vsel %vm300, %v297, %v299
  %309 = vst [vmem:[#allocation3 + $0x40] sm:$0xff] %v301
  %310 = vst [vmem:[#allocation3 + $0x48] sm:$0xff] %v302
  %311 = vst [vmem:[#allocation3 + $0x50] sm:$0xff] %v303
  %312 = vst [vmem:[#allocation3 + $0x58] sm:$0xff] %v304
  %v313 = vld [vmem:[#allocation2] sm:$0xff]
  %v314 = vld [vmem:[#allocation2 + $0x8] sm:$0xff]
  %v315 = vld [vmem:[#allocation2 + $0x10] sm:$0xff]
  %v316 = vld [vmem:[#allocation2 + $0x18] sm:$0xff]
  %v317 = vld [vmem:[#allocation2 + $0x20] sm:$0xff]
  %v318 = vld [vmem:[#allocation2 + $0x28] sm:$0xff]
  %v319 = vld [vmem:[#allocation2 + $0x30] sm:$0xff]
  %v320 = vld [vmem:[#allocation2 + $0x38] sm:$0xff]
  %329 = vrot.lane.b32.xlu0 %v313, 123
  %v330 = vpop.permute.xlu0 %329
  %331 = vrot.lane.b32.xlu0 %v314, 123
  %v332 = vpop.permute.xlu0 %331
  %333 = vrot.lane.b32.xlu0 %v315, 123
  %v334 = vpop.permute.xlu0 %333
  %335 = vrot.lane.b32.xlu0 %v316, 123
  %v336 = vpop.permute.xlu0 %335
  %337 = vrot.lane.b32.xlu0 %v317, 123
  %v338 = vpop.permute.xlu0 %337
  %339 = vrot.lane.b32.xlu0 %v318, 123
  %v340 = vpop.permute.xlu0 %339
  %341 = vrot.lane.b32.xlu0 %v319, 123
  %v342 = vpop.permute.xlu0 %341
  %343 = vrot.lane.b32.xlu0 %v320, 123
  %v344 = vpop.permute.xlu0 %343
  %vm345 = vcmask 1006592
  %v346 = vsel %vm345, %v330, %v332
  %v347 = vsel %vm345, %v334, %v336
  %v348 = vsel %vm345, %v338, %v340
  %v349 = vsel %vm345, %v342, %v344
  %354 = vst [vmem:[#allocation3 + $0x60] sm:$0xff] %v346
  %355 = vst [vmem:[#allocation3 + $0x68] sm:$0xff] %v347
  %356 = vst [vmem:[#allocation3 + $0x70] sm:$0xff] %v348
  %357 = vst [vmem:[#allocation3 + $0x78] sm:$0xff] %v349
  %v358 = vld [vmem:[#allocation2] sm:$0xff]
  %v359 = vld [vmem:[#allocation2 + $0x8] sm:$0xff]
  %v360 = vld [vmem:[#allocation2 + $0x10] sm:$0xff]
  %v361 = vld [vmem:[#allocation2 + $0x18] sm:$0xff]
  %v362 = vld [vmem:[#allocation2 + $0x20] sm:$0xff]
  %v363 = vld [vmem:[#allocation2 + $0x28] sm:$0xff]
  %v364 = vld [vmem:[#allocation2 + $0x30] sm:$0xff]
  %v365 = vld [vmem:[#allocation2 + $0x38] sm:$0xff]
  %374 = vrot.lane.b32.xlu0 %v358, 124
  %v375 = vpop.permute.xlu0 %374
  %376 = vrot.lane.b32.xlu0 %v359, 124
  %v377 = vpop.permute.xlu0 %376
  %378 = vrot.lane.b32.xlu0 %v360, 124
  %v379 = vpop.permute.xlu0 %378
  %380 = vrot.lane.b32.xlu0 %v361, 124
  %v381 = vpop.permute.xlu0 %380
  %382 = vrot.lane.b32.xlu0 %v362, 124
  %v383 = vpop.permute.xlu0 %382
  %384 = vrot.lane.b32.xlu0 %v363, 124
  %v385 = vpop.permute.xlu0 %384
  %386 = vrot.lane.b32.xlu0 %v364, 124
  %v387 = vpop.permute.xlu0 %386
  %388 = vrot.lane.b32.xlu0 %v365, 124
  %v389 = vpop.permute.xlu0 %388
  %vm390 = vcmask 1014784
  %v391 = vsel %vm390, %v375, %v377
  %v392 = vsel %vm390, %v379, %v381
  %v393 = vsel %vm390, %v383, %v385
  %v394 = vsel %vm390, %v387, %v389
  %399 = vst [vmem:[#allocation3 + $0x80] sm:$0xff] %v391
  %400 = vst [vmem:[#allocation3 + $0x88] sm:$0xff] %v392
  %401 = vst [vmem:[#allocation3 + $0x90] sm:$0xff] %v393
  %402 = vst [vmem:[#allocation3 + $0x98] sm:$0xff] %v394
  %v403 = vld [vmem:[#allocation2] sm:$0xff]
  %v404 = vld [vmem:[#allocation2 + $0x8] sm:$0xff]
  %v405 = vld [vmem:[#allocation2 + $0x10] sm:$0xff]
  %v406 = vld [vmem:[#allocation2 + $0x18] sm:$0xff]
  %v407 = vld [vmem:[#allocation2 + $0x20] sm:$0xff]
  %v408 = vld [vmem:[#allocation2 + $0x28] sm:$0xff]
  %v409 = vld [vmem:[#allocation2 + $0x30] sm:$0xff]
  %v410 = vld [vmem:[#allocation2 + $0x38] sm:$0xff]
  %419 = vrot.lane.b32.xlu0 %v403, 125
  %v420 = vpop.permute.xlu0 %419
  %421 = vrot.lane.b32.xlu0 %v404, 125
  %v422 = vpop.permute.xlu0 %421
  %423 = vrot.lane.b32.xlu0 %v405, 125
  %v424 = vpop.permute.xlu0 %423
  %425 = vrot.lane.b32.xlu0 %v406, 125
  %v426 = vpop.permute.xlu0 %425
  %427 = vrot.lane.b32.xlu0 %v407, 125
  %v428 = vpop.permute.xlu0 %427
  %429 = vrot.lane.b32.xlu0 %v408, 125
  %v430 = vpop.permute.xlu0 %429
  %431 = vrot.lane.b32.xlu0 %v409, 125
  %v432 = vpop.permute.xlu0 %431
  %433 = vrot.lane.b32.xlu0 %v410, 125
  %v434 = vpop.permute.xlu0 %433
  %vm435 = vcmask 1022976
  %v436 = vsel %vm435, %v420, %v422
  %v437 = vsel %vm435, %v424, %v426
  %v438 = vsel %vm435, %v428, %v430
  %v439 = vsel %vm435, %v432, %v434
  %444 = vst [vmem:[#allocation3 + $0xa0] sm:$0xff] %v436
  %445 = vst [vmem:[#allocation3 + $0xa8] sm:$0xff] %v437
  %446 = vst [vmem:[#allocation3 + $0xb0] sm:$0xff] %v438
  %447 = vst [vmem:[#allocation3 + $0xb8] sm:$0xff] %v439
  %v448 = vld [vmem:[#allocation2] sm:$0xff]
  %v449 = vld [vmem:[#allocation2 + $0x8] sm:$0xff]
  %v450 = vld [vmem:[#allocation2 + $0x10] sm:$0xff]
  %v451 = vld [vmem:[#allocation2 + $0x18] sm:$0xff]
  %v452 = vld [vmem:[#allocation2 + $0x20] sm:$0xff]
  %v453 = vld [vmem:[#allocation2 + $0x28] sm:$0xff]
  %v454 = vld [vmem:[#allocation2 + $0x30] sm:$0xff]
  %v455 = vld [vmem:[#allocation2 + $0x38] sm:$0xff]
  %464 = vrot.lane.b32.xlu0 %v448, 126
  %v465 = vpop.permute.xlu0 %464
  %466 = vrot.lane.b32.xlu0 %v449, 126
  %v467 = vpop.permute.xlu0 %466
  %468 = vrot.lane.b32.xlu0 %v450, 126
  %v469 = vpop.permute.xlu0 %468
  %470 = vrot.lane.b32.xlu0 %v451, 126
  %v471 = vpop.permute.xlu0 %470
  %472 = vrot.lane.b32.xlu0 %v452, 126
  %v473 = vpop.permute.xlu0 %472
  %474 = vrot.lane.b32.xlu0 %v453, 126
  %v475 = vpop.permute.xlu0 %474
  %476 = vrot.lane.b32.xlu0 %v454, 126
  %v477 = vpop.permute.xlu0 %476
  %478 = vrot.lane.b32.xlu0 %v455, 126
  %v479 = vpop.permute.xlu0 %478
  %vm480 = vcmask 1031168
  %v481 = vsel %vm480, %v465, %v467
  %v482 = vsel %vm480, %v469, %v471
  %v483 = vsel %vm480, %v473, %v475
  %v484 = vsel %vm480, %v477, %v479
  %489 = vst [vmem:[#allocation3 + $0xc0] sm:$0xff] %v481
  %490 = vst [vmem:[#allocation3 + $0xc8] sm:$0xff] %v482
  %491 = vst [vmem:[#allocation3 + $0xd0] sm:$0xff] %v483
  %492 = vst [vmem:[#allocation3 + $0xd8] sm:$0xff] %v484
  %v493 = vld [vmem:[#allocation2] sm:$0xff]
  %v494 = vld [vmem:[#allocation2 + $0x8] sm:$0xff]
  %v495 = vld [vmem:[#allocation2 + $0x10] sm:$0xff]
  %v496 = vld [vmem:[#allocation2 + $0x18] sm:$0xff]
  %v497 = vld [vmem:[#allocation2 + $0x20] sm:$0xff]
  %v498 = vld [vmem:[#allocation2 + $0x28] sm:$0xff]
  %v499 = vld [vmem:[#allocation2 + $0x30] sm:$0xff]
  %v500 = vld [vmem:[#allocation2 + $0x38] sm:$0xff]
  %509 = vrot.lane.b32.xlu0 %v493, 127
  %v510 = vpop.permute.xlu0 %509
  %511 = vrot.lane.b32.xlu0 %v494, 127
  %v512 = vpop.permute.xlu0 %511
  %513 = vrot.lane.b32.xlu0 %v495, 127
  %v514 = vpop.permute.xlu0 %513
  %515 = vrot.lane.b32.xlu0 %v496, 127
  %v516 = vpop.permute.xlu0 %515
  %517 = vrot.lane.b32.xlu0 %v497, 127
  %v518 = vpop.permute.xlu0 %517
  %519 = vrot.lane.b32.xlu0 %v498, 127
  %v520 = vpop.permute.xlu0 %519
  %521 = vrot.lane.b32.xlu0 %v499, 127
  %v522 = vpop.permute.xlu0 %521
  %523 = vrot.lane.b32.xlu0 %v500, 127
  %v524 = vpop.permute.xlu0 %523
  %vm525 = vcmask 1039360
  %v526 = vsel %vm525, %v510, %v512
  %v527 = vsel %vm525, %v514, %v516
  %v528 = vsel %vm525, %v518, %v520
  %v529 = vsel %vm525, %v522, %v524
  %534 = vst [vmem:[#allocation3 + $0xe0] sm:$0xff] %v526
  %535 = vst [vmem:[#allocation3 + $0xe8] sm:$0xff] %v527
  %536 = vst [vmem:[#allocation3 + $0xf0] sm:$0xff] %v528
  %537 = vst [vmem:[#allocation3 + $0xf8] sm:$0xff] %v529
  %v538 = vld [vmem:[#allocation2] sm:$0xff]
  %v539 = vld [vmem:[#allocation2 + $0x10] sm:$0xff]
  %v540 = vld [vmem:[#allocation2 + $0x20] sm:$0xff]
  %v541 = vld [vmem:[#allocation2 + $0x30] sm:$0xff]
  %542 = vst [vmem:[#allocation3 + $0x100] sm:$0xff] %v538
  %543 = vst [vmem:[#allocation3 + $0x108] sm:$0xff] %v539
  %544 = vst [vmem:[#allocation3 + $0x110] sm:$0xff] %v540
  %545 = vst [vmem:[#allocation3 + $0x118] sm:$0xff] %v541
  %v546 = vld [vmem:[%s2] sm:$0xff]
  %v547 = vld [vmem:[%s2 + $0x8] sm:$0xff]
  %v548 = vld [vmem:[%s2 + $0x10] sm:$0xff]
  %v549 = vld [vmem:[%s2 + $0x18] sm:$0xff]
  %v550 = vld [vmem:[%s2 + $0x20] sm:$0xff]
  %v551 = vld [vmem:[%s2 + $0x28] sm:$0xff]
  %v552 = vld [vmem:[%s2 + $0x30] sm:$0xff]
  %v553 = vld [vmem:[%s2 + $0x38] sm:$0xff]
  %v554 = vld [vmem:[%s2 + $0x40] sm:$0xff]
  %v555 = vld [vmem:[#allocation3] sm:$0xff]
  %v556 = vld [vmem:[#allocation3 + $0x8] sm:$0xff]
  %v557 = vld [vmem:[#allocation3 + $0x10] sm:$0xff]
  %v558 = vld [vmem:[#allocation3 + $0x18] sm:$0xff]
  %v559 = vld [vmem:[#allocation3 + $0x20] sm:$0xff]
  %v560 = vld [vmem:[#allocation3 + $0x28] sm:$0xff]
  %v561 = vld [vmem:[#allocation3 + $0x30] sm:$0xff]
  %v562 = vld [vmem:[#allocation3 + $0x38] sm:$0xff]
  %v563 = vld [vmem:[#allocation3 + $0x40] sm:$0xff]
  %v564 = vld [vmem:[#allocation3 + $0x48] sm:$0xff]
  %v565 = vld [vmem:[#allocation3 + $0x50] sm:$0xff]
  %v566 = vld [vmem:[#allocation3 + $0x58] sm:$0xff]
  %v567 = vld [vmem:[#allocation3 + $0x60] sm:$0xff]
  %v568 = vld [vmem:[#allocation3 + $0x68] sm:$0xff]
  %v569 = vld [vmem:[#allocation3 + $0x70] sm:$0xff]
  %v570 = vld [vmem:[#allocation3 + $0x78] sm:$0xff]
  %v571 = vld [vmem:[#allocation3 + $0x80] sm:$0xff]
  %v572 = vld [vmem:[#allocation3 + $0x88] sm:$0xff]
  %v573 = vld [vmem:[#allocation3 + $0x90] sm:$0xff]
  %v574 = vld [vmem:[#allocation3 + $0x98] sm:$0xff]
  %v575 = vld [vmem:[#allocation3 + $0xa0] sm:$0xff]
  %v576 = vld [vmem:[#allocation3 + $0xa8] sm:$0xff]
  %v577 = vld [vmem:[#allocation3 + $0xb0] sm:$0xff]
  %v578 = vld [vmem:[#allocation3 + $0xb8] sm:$0xff]
  %v579 = vld [vmem:[#allocation3 + $0xc0] sm:$0xff]
  %v580 = vld [vmem:[#allocation3 + $0xc8] sm:$0xff]
  %v581 = vld [vmem:[#allocation3 + $0xd0] sm:$0xff]
  %v582 = vld [vmem:[#allocation3 + $0xd8] sm:$0xff]
  %v583 = vld [vmem:[#allocation3 + $0xe0] sm:$0xff]
  %v584 = vld [vmem:[#allocation3 + $0xe8] sm:$0xff]
  %v585 = vld [vmem:[#allocation3 + $0xf0] sm:$0xff]
  %v586 = vld [vmem:[#allocation3 + $0xf8] sm:$0xff]
  %v587 = vld [vmem:[#allocation3 + $0x100] sm:$0xff]
  %v588 = vld [vmem:[#allocation3 + $0x108] sm:$0xff]
  %v589 = vld [vmem:[#allocation3 + $0x110] sm:$0xff]
  %v590 = vld [vmem:[#allocation3 + $0x118] sm:$0xff]
  %v591 = vstv %s18
  %vm592 = vcmask 261120
  %v594 = vsel %vm592, %v548, 0
  %v597 = vsel %vm592, %v551, 0
  %v600 = vsel %vm592, %v554, 0
  %602 = vmatprep.subr.mxu0 0.0
  %603 = vmatpush1.msra.mxu0 %v555
  %604 = vmatprep.subr.mxu0 0.0
  %605 = vmatpush1.msra.mxu0 %v556
  %606 = vmatprep.subr.mxu0 0.0
  %607 = vmatpush1.msra.mxu0 %v557
  %608 = vmatprep.subr.mxu0 0.0
  %609 = vmatpush1.msra.mxu0 %v558
  %610 = vmatprep.subr.mxu0 0.0
  %611 = vmatpush1.msra.mxu0 %v559
  %612 = vmatprep.subr.mxu0 0.0
  %613 = vmatpush1.msra.mxu0 %v560
  %614 = vmatprep.subr.mxu0 0.0
  %615 = vmatpush1.msra.mxu0 %v561
  %616 = vmatprep.subr.mxu0 0.0
  %617 = vmatpush1.msra.mxu0 %v562
  %618 = vmatprep.subr.mxu0 0.0
  %619 = vmatpush1.msra.mxu0 %v563
  %620 = vmatprep.subr.mxu0 0.0
  %621 = vmatpush1.msra.mxu0 %v564
  %622 = vmatprep.subr.mxu0 0.0
  %623 = vmatpush1.msra.mxu0 %v565
  %624 = vmatprep.subr.mxu0 0.0
  %625 = vmatpush1.msra.mxu0 %v566
  %626 = vmatprep.subr.mxu0 0.0
  %627 = vmatpush1.msra.mxu0 %v567
  %628 = vmatprep.subr.mxu0 0.0
  %629 = vmatpush1.msra.mxu0 %v568
  %630 = vmatprep.subr.mxu0 0.0
  %631 = vmatpush1.msra.mxu0 %v569
  %632 = vmatprep.subr.mxu0 0.0
  %633 = vmatpush1.msra.mxu0 %v570
  %634 = vmatprep.subr.mxu0 0.0
  %635 = vmatpush1.msra.mxu0 %v571
  %636 = vmatprep.subr.mxu0 0.0
  %637 = vmatpush1.msra.mxu0 %v572
  %638 = vmatprep.subr.mxu0 0.0
  %639 = vmatpush1.msra.mxu0 %v573
  %640 = vmatprep.subr.mxu0 0.0
  %641 = vmatpush1.msra.mxu0 %v574
  %642 = vmatprep.subr.mxu0 0.0
  %643 = vmatpush1.msra.mxu0 %v575
  %644 = vmatprep.subr.mxu0 0.0
  %645 = vmatpush1.msra.mxu0 %v576
  %646 = vmatprep.subr.mxu0 0.0
  %647 = vmatpush1.msra.mxu0 %v577
  %648 = vmatprep.subr.mxu0 0.0
  %649 = vmatpush1.msra.mxu0 %v578
  %650 = vmatprep.subr.mxu0 0.0
  %651 = vmatpush1.msra.mxu0 %v579
  %652 = vmatprep.subr.mxu0 0.0
  %653 = vmatpush1.msra.mxu0 %v580
  %654 = vmatprep.subr.mxu0 0.0
  %655 = vmatpush1.msra.mxu0 %v581
  %656 = vmatprep.subr.mxu0 0.0
  %657 = vmatpush1.msra.mxu0 %v582
  %658 = vmatprep.subr.mxu0 0.0
  %659 = vmatpush1.msra.mxu0 %v583
  %660 = vmatprep.subr.mxu0 0.0
  %661 = vmatpush1.msra.mxu0 %v584
  %662 = vmatprep.subr.mxu0 0.0
  %663 = vmatpush1.msra.mxu0 %v585
  %664 = vmatprep.subr.mxu0 0.0
  %665 = vmatpush1.msra.mxu0 %v586
  %666 = vmatprep.mubr.f32.mxu0 %v547
  %667 = vmatmul.mubr.f32.gmra.mrb[0].mxu0 %v546
  %v668 = vpop.f32.mrb[0].mxu0
  %v669 = vadd.f32 %v591, %v668
  %v670 = vpop.f32.mrb[0].mxu0
  %671 = vmatprep.mubr.f32.mxu0 %v550
  %672 = vmatmul.mubr.f32.gmra.mrb[0].mxu0 %v549
  %v673 = vpop.f32.mrb[0].mxu0
  %v674 = vadd.f32 %v591, %v673
  %v675 = vpop.f32.mrb[0].mxu0
  %676 = vmatprep.mubr.f32.mxu0 %v553
  %677 = vmatmul.mubr.f32.gmra.mrb[0].mxu0 %v552
  %v678 = vpop.f32.mrb[0].mxu0
  %v679 = vadd.f32 %v591, %v678
  %v680 = vpop.f32.mrb[0].mxu0
  %681 = vdwg.mxu0
  %682 = vmatprep.subr.mxu0 0.0
  %683 = vmatpush1.msra.mxu0 %v587
  %684 = vmatprep.subr.mxu0 0.0
  %685 = vmatpush1.msra.mxu0 %v588
  %686 = vmatprep.subr.mxu0 0.0
  %687 = vmatpush1.msra.mxu0 %v589
  %688 = vmatprep.subr.mxu0 0.0
  %689 = vmatpush1.msra.mxu0 %v590
  %690 = vmatprep.subr.mxu0 0.0
  %691 = vmatpush1.msra.mxu0 0.0
  %692 = vmatprep.subr.mxu0 0.0
  %693 = vmatpush1.msra.mxu0 0.0
  %694 = vmatprep.subr.mxu0 0.0
  %695 = vmatpush1.msra.mxu0 0.0
  %696 = vmatprep.subr.mxu0 0.0
  %697 = vmatpush1.msra.mxu0 0.0
  %698 = vmatprep.subr.mxu0 0.0
  %699 = vmatpush1.msra.mxu0 0.0
  %700 = vmatprep.subr.mxu0 0.0
  %701 = vmatpush1.msra.mxu0 0.0
  %702 = vmatprep.subr.mxu0 0.0
  %703 = vmatpush1.msra.mxu0 0.0
  %704 = vmatprep.subr.mxu0 0.0
  %705 = vmatpush1.msra.mxu0 0.0
  %706 = vmatprep.subr.mxu0 0.0
  %707 = vmatpush1.msra.mxu0 0.0
  %708 = vmatprep.subr.mxu0 0.0
  %709 = vmatpush1.msra.mxu0 0.0
  %710 = vmatprep.subr.mxu0 0.0
  %711 = vmatpush1.msra.mxu0 0.0
  %712 = vmatprep.subr.mxu0 0.0
  %713 = vmatpush1.msra.mxu0 0.0
  %714 = vmatprep.subr.mxu0 0.0
  %715 = vmatpush1.msra.mxu0 0.0
  %716 = vmatprep.subr.mxu0 0.0
  %717 = vmatpush1.msra.mxu0 0.0
  %718 = vmatprep.subr.mxu0 0.0
  %719 = vmatpush1.msra.mxu0 0.0
  %720 = vmatprep.subr.mxu0 0.0
  %721 = vmatpush1.msra.mxu0 0.0
  %722 = vmatprep.subr.mxu0 0.0
  %723 = vmatpush1.msra.mxu0 0.0
  %724 = vmatprep.subr.mxu0 0.0
  %725 = vmatpush1.msra.mxu0 0.0
  %726 = vmatprep.subr.mxu0 0.0
  %727 = vmatpush1.msra.mxu0 0.0
  %728 = vmatprep.subr.mxu0 0.0
  %729 = vmatpush1.msra.mxu0 0.0
  %730 = vmatprep.subr.mxu0 0.0
  %731 = vmatpush1.msra.mxu0 0.0
  %732 = vmatprep.subr.mxu0 0.0
  %733 = vmatpush1.msra.mxu0 0.0
  %734 = vmatprep.subr.mxu0 0.0
  %735 = vmatpush1.msra.mxu0 0.0
  %736 = vmatprep.subr.mxu0 0.0
  %737 = vmatpush1.msra.mxu0 0.0
  %738 = vmatprep.subr.mxu0 0.0
  %739 = vmatpush1.msra.mxu0 0.0
  %740 = vmatprep.subr.mxu0 0.0
  %741 = vmatpush1.msra.mxu0 0.0
  %742 = vmatprep.subr.mxu0 0.0
  %743 = vmatpush1.msra.mxu0 0.0
  %744 = vmatprep.subr.mxu0 0.0
  %745 = vmatpush1.msra.mxu0 0.0
  %746 = vmatprep.mubr.f32.mxu0 0.0
  %747 = vmatmul.mubr.f32.gmra.mrb[0].mxu0 %v594
  %v748 = vpop.f32.mrb[0].mxu0
  %v749 = vadd.f32 %v669, %v748
  %v750 = vpop.f32.mrb[0].mxu0
  %751 = vmatprep.mubr.f32.mxu0 0.0
  %752 = vmatmul.mubr.f32.gmra.mrb[0].mxu0 %v597
  %v753 = vpop.f32.mrb[0].mxu0
  %v754 = vadd.f32 %v674, %v753
  %v755 = vpop.f32.mrb[0].mxu0
  %756 = vmatprep.mubr.f32.mxu0 0.0
  %757 = vmatmul.mubr.f32.gmra.mrb[0].mxu0 %v600
  %v758 = vpop.f32.mrb[0].mxu0
  %v759 = vadd.f32 %v679, %v758
  %v760 = vpop.f32.mrb[0].mxu0
  %761 = vdwg.mxu0
  %v762 = vxor.u32 %v749, 2147483648
  %v763 = vxor.u32 %v754, 2147483648
  %v764 = vxor.u32 %v759, 2147483648
  %v765 = vmul.f32 %v762, 1.442695
  %v766 = vpow.pop %v765
  %v767 = vmul.f32 %v763, 1.442695
  %v768 = vpow.pop %v767
  %v769 = vmul.f32 %v764, 1.442695
  %v770 = vpow.pop %v769
  %v771 = vadd.f32 %v766, 1.0
  %v772 = vadd.f32 %v768, 1.0
  %v773 = vadd.f32 %v770, 1.0
  %v774 = vrcp.pop %v771
  %v775 = vmul.f32 1.0, %v774
  %v776 = vrcp.pop %v772
  %v777 = vmul.f32 1.0, %v776
  %v778 = vrcp.pop %v773
  %v779 = vmul.f32 1.0, %v778
  %780 = vst [vmem:[%s4] sm:$0xff] %v775
  %781 = vst [vmem:[%s4 + $0x8] sm:$0xff] %v777
  %782 = vst [vmem:[%s4 + $0x10] sm:$0xff] %v779
  // Predicated region
  $region18: #{model_forward.1} parent=0 // pred_check
    _
  $region19: #{model_forward.1} parent=0 // pred_check_branch
    %784 = sbr.rel (0) target = $region21
  $region20: #{model_forward.1} parent=0 // pred_region
    _
  $region21: #{model_forward.1} parent=0 // pred_fallthru
    _
  // Predicated region
  $region22: #{model_forward.1} parent=0 // pred_check
    _
  $region23: #{model_forward.1} parent=0 // pred_check_branch
    %786 = sbr.rel (0) target = $region25
  $region24: #{model_forward.1} parent=0 // pred_region
    _
  $region25: #{model_forward.1} parent=0 // pred_fallthru
    _

</llo_original>
